<compile_context>
chip_gen: v6e
topology: v6e:2x2x1
jax: 0.10.0
libtpu: 0.0.40
codegen_flags: <defaults>
</compile_context>

<pallas_src>
import jax
import jax.numpy as jnp
from jax import lax
from jax.experimental import pallas as pl
from jax.experimental.pallas import tpu as pltpu


def _make_spp_kernel(W, HW, DHWp):
    steps = (1, W, HW)  # flat-index stride of a +/-1 step along W, H, D

    def kernel(x_ref, masks_ref, wx_ref, w3_ref, w5_ref, b_ref, out_ref):
        # x_ref:     (NB*C, DHWp)   NB samples packed on sublanes, spatial on lanes
        # masks_ref: (6, DHWp)      additive 0/-inf masks [loW, hiW, loH, hiH, loD, hiD]
        # w*_ref:    (NB*O, NB*C)   block-diagonal folded 1x1x1 conv weights
        # b_ref:     (NB*O, 1)      per-sample-packed bias
        # out_ref:   (NB*O, DHWp)

        def pool3(v):
            """Separable 3x3x3 max pool, stride 1, 'same' (-inf) padding."""
            for i, st in enumerate(steps):
                lo = masks_ref[2 * i:2 * i + 1, :]        # neighbour at flat-st valid?
                hi = masks_ref[2 * i + 1:2 * i + 2, :]    # neighbour at flat+st valid?
                below = pltpu.roll(v, st, 1) + lo         # v[..., j - st]  (wrap masked)
                above = pltpu.roll(v, DHWp - st, 1) + hi  # v[..., j + st]  (wrap masked)
                v = jnp.maximum(v, jnp.maximum(below, above))
            return v

        x = x_ref[...].astype(jnp.float32)
        p3 = pool3(x)     # MaxPool3d(kernel=3, pad=1)
        p5 = pool3(p3)    # MaxPool3d(kernel=5, pad=2) == 3-pool applied twice

        # Weight-stationary 1x1x1 conv, identity branch folded into wx.
        acc = jnp.dot(wx_ref[...].astype(jnp.float32), x,
                      preferred_element_type=jnp.float32)
        acc = acc + jnp.dot(w3_ref[...].astype(jnp.float32), p3,
                            preferred_element_type=jnp.float32)
        acc = acc + jnp.dot(w5_ref[...].astype(jnp.float32), p5,
                            preferred_element_type=jnp.float32)
        out_ref[...] = (acc + b_ref[...].astype(jnp.float32)).astype(out_ref.dtype)

    return kernel


def spp_forward(x, weight, bias):
    """x: (N, C, D, H, W); weight: (O, 4C); bias: (O,). Returns (N, O, D, H, W)."""
    N, C, D, H, W = x.shape
    O, K4 = weight.shape
    assert K4 == 4 * C
    HW = H * W
    DHW = D * HW
    DHWp = ((DHW + 127) // 128) * 128      # lane-dense last dim

    # Samples per grid step: fill the 8-row f32 sublane tile when C is small.
    NB = 1
    for cand in range(min(N, 8), 0, -1):
        if N % cand == 0 and (cand * C) % 8 == 0:
            NB = cand
            break
    NG = N // NB
    NBC, NBO = NB * C, NB * O

    # Fold the identity (MaxPool3d(1)) branch into the x-weights, then make the
    # per-sample 1x1x1 conv one block-diagonal matmul over the NB packed samples.
    wx = weight[:, 0 * C:1 * C] + weight[:, 1 * C:2 * C]
    w3 = weight[:, 2 * C:3 * C]
    w5 = weight[:, 3 * C:4 * C]
    eye = jnp.eye(NB, dtype=weight.dtype)
    wx_b, w3_b, w5_b = (jnp.kron(eye, w) for w in (wx, w3, w5))
    b_b = jnp.tile(bias.reshape(O, 1), (NB, 1))

    # Boundary masks, hoisted out of the kernel: 0 where the shifted neighbour is
    # a real neighbour along that axis, -inf where the shift would wrap across a
    # row / plane / volume edge (or into the lane padding).
    neg = float("-inf")
    flat = jnp.arange(DHWp, dtype=jnp.int32)
    w_i = flat % W
    h_i = (flat // W) % H
    d_i = flat // HW
    masks = jnp.stack([
        jnp.where(w_i >= 1, 0.0, neg), jnp.where(w_i <= W - 2, 0.0, neg),
        jnp.where(h_i >= 1, 0.0, neg), jnp.where(h_i <= H - 2, 0.0, neg),
        jnp.where(d_i >= 1, 0.0, neg), jnp.where(d_i <= D - 2, 0.0, neg),
    ]).astype(jnp.float32)

    # Contiguous (free) reshapes: channel-major, spatial flattened on the lanes,
    # NB samples packed into the sublane dim.
    x2 = x.reshape(N, C, DHW)
    if DHWp != DHW:
        x2 = jnp.pad(x2, ((0, 0), (0, 0), (0, DHWp - DHW)))
    x2 = x2.reshape(NG, NBC, DHWp)

    kernel = _make_spp_kernel(W, HW, DHWp)

    # TODO(synk): for large real shapes (e.g. C=64, D=H=W=32) add a D-tiled grid
    # axis with a 2-plane halo and set vmem_limit_bytes explicitly (v7x: 64 MiB
    # physical VMEM); the demo blocks are only a few tens of KiB.
    out = pl.pallas_call(
        kernel,
        out_shape=jax.ShapeDtypeStruct((NG, NBO, DHWp), x.dtype),
        grid=(NG,),
        in_specs=[
            pl.BlockSpec((None, NBC, DHWp), lambda n: (n, 0, 0)),
            pl.BlockSpec((6, DHWp), lambda n: (0, 0)),
            pl.BlockSpec((NBO, NBC), lambda n: (0, 0)),
            pl.BlockSpec((NBO, NBC), lambda n: (0, 0)),
            pl.BlockSpec((NBO, NBC), lambda n: (0, 0)),
            pl.BlockSpec((NBO, 1), lambda n: (0, 0)),
        ],
        out_specs=pl.BlockSpec((None, NBO, DHWp), lambda n: (n, 0, 0)),
        compiler_params=pltpu.CompilerParams(
            dimension_semantics=("parallel",)),
    )(x2, masks, wx_b, w3_b, w5_b, b_b)

    out = out.reshape(N, O, DHWp)[:, :, :DHW]
    return out.reshape(N, O, D, H, W)


def spp_reference(x, weight, bias):
    """Pure-JAX reference mirroring the PyTorch forward."""
    def mp(x, k):
        p = k // 2
        return lax.reduce_window(x, -jnp.inf, lax.max,
                                 (1, 1, k, k, k), (1, 1, 1, 1, 1),
                                 [(0, 0), (0, 0), (p, p), (p, p), (p, p)])
    cat = jnp.concatenate([x, mp(x, 1), mp(x, 3), mp(x, 5)], axis=1)
    return (jnp.einsum('ok,nkdhw->nodhw', weight, cat)
            + bias[None, :, None, None, None])


if __name__ == "__main__":
    key = jax.random.PRNGKey(0)
    kx, kw, kb = jax.random.split(key, 3)

    N, C, D, H, W = 2, 4, 8, 8, 8          # in_channels = 4
    O = 8                                   # out_channels = 8

    x = jax.random.normal(kx, (N, C, D, H, W), dtype=jnp.float32)
    # Deterministic synthetic parameters (Conv3d(4*C, O, kernel_size=1)).
    weight = 0.1 * jax.random.normal(kw, (O, 4 * C), dtype=jnp.float32)
    bias = 0.1 * jax.random.normal(kb, (O,), dtype=jnp.float32)

    out = jax.jit(spp_forward)(x, weight, bias)
    out = jax.block_until_ready(out)

    ref = spp_reference(x, weight, bias)
    assert out.shape == (N, O, D, H, W), out.shape
    err = float(jnp.max(jnp.abs(out - ref)))
    assert err < 1e-4, err
    print("KERNEL_OK")
</pallas_src>

<mosaic_0001>
module attributes {stable_mosaic.version = 11 : i64} {
  func.func @kernel(%arg0: i32, %arg1: memref<1x8x512xf32, #tpu.memory_space<vmem>>, %arg2: memref<6x512xf32, #tpu.memory_space<vmem>>, %arg3: memref<16x8xf32, #tpu.memory_space<vmem>>, %arg4: memref<16x8xf32, #tpu.memory_space<vmem>>, %arg5: memref<16x8xf32, #tpu.memory_space<vmem>>, %arg6: memref<16x1xf32, #tpu.memory_space<vmem>>, %arg7: memref<1x16x512xf32, #tpu.memory_space<vmem>>) attributes {dimension_semantics = [#tpu.dimension_semantics<parallel>], iteration_bounds = array<i64: 1>, scalar_prefetch = 0 : i64, scratch_operands = 0 : i64, tpu.core_type = #tpu.core_type<tc>, window_params = [{transform_indices = @transform_0, window_bounds = array<i64: 1, 8, 512>}, {pipeline_mode = #tpu.pipeline_mode<synchronous>, transform_indices = @transform_1, window_bounds = array<i64: 6, 512>}, {pipeline_mode = #tpu.pipeline_mode<synchronous>, transform_indices = @transform_2, window_bounds = array<i64: 16, 8>}, {pipeline_mode = #tpu.pipeline_mode<synchronous>, transform_indices = @transform_3, window_bounds = array<i64: 16, 8>}, {pipeline_mode = #tpu.pipeline_mode<synchronous>, transform_indices = @transform_4, window_bounds = array<i64: 16, 8>}, {pipeline_mode = #tpu.pipeline_mode<synchronous>, transform_indices = @transform_5, window_bounds = array<i64: 16, 1>}, {transform_indices = @transform_6, window_bounds = array<i64: 1, 16, 512>}]} {
    %c0 = arith.constant 0 : index
    %c0_0 = arith.constant 0 : index
    %c0_1 = arith.constant 0 : index
    %0 = vector.load %arg1[%c0, %c0_0, %c0_1] : memref<1x8x512xf32, #tpu.memory_space<vmem>>, vector<1x8x512xf32>
    %1 = vector.shape_cast %0 : vector<1x8x512xf32> to vector<8x512xf32>
    %c0_2 = arith.constant 0 : index
    %c0_3 = arith.constant 0 : index
    %2 = vector.load %arg2[%c0_2, %c0_3] : memref<6x512xf32, #tpu.memory_space<vmem>>, vector<1x512xf32>
    %c1 = arith.constant 1 : index
    %c0_4 = arith.constant 0 : index
    %3 = vector.load %arg2[%c1, %c0_4] : memref<6x512xf32, #tpu.memory_space<vmem>>, vector<1x512xf32>
    %c1_i32 = arith.constant 1 : i32
    %4 = tpu.dynamic_rotate %1 by %c1_i32 dim 1 : vector<8x512xf32>, i32 -> vector<8x512xf32>
    %5 = vector.broadcast %2 : vector<1x512xf32> to vector<8x512xf32>
    %6 = arith.addf %4, %5 : vector<8x512xf32>
    %c511_i32 = arith.constant 511 : i32
    %7 = tpu.dynamic_rotate %1 by %c511_i32 dim 1 : vector<8x512xf32>, i32 -> vector<8x512xf32>
    %8 = vector.broadcast %3 : vector<1x512xf32> to vector<8x512xf32>
    %9 = arith.addf %7, %8 : vector<8x512xf32>
    %10 = arith.maximumf %6, %9 : vector<8x512xf32>
    %11 = arith.maximumf %1, %10 : vector<8x512xf32>
    %c2 = arith.constant 2 : index
    %c0_5 = arith.constant 0 : index
    %12 = vector.load %arg2[%c2, %c0_5] : memref<6x512xf32, #tpu.memory_space<vmem>>, vector<1x512xf32>
    %c3 = arith.constant 3 : index
    %c0_6 = arith.constant 0 : index
    %13 = vector.load %arg2[%c3, %c0_6] : memref<6x512xf32, #tpu.memory_space<vmem>>, vector<1x512xf32>
    %c8_i32 = arith.constant 8 : i32
    %14 = tpu.dynamic_rotate %11 by %c8_i32 dim 1 : vector<8x512xf32>, i32 -> vector<8x512xf32>
    %15 = vector.broadcast %12 : vector<1x512xf32> to vector<8x512xf32>
    %16 = arith.addf %14, %15 : vector<8x512xf32>
    %c504_i32 = arith.constant 504 : i32
    %17 = tpu.dynamic_rotate %11 by %c504_i32 dim 1 : vector<8x512xf32>, i32 -> vector<8x512xf32>
    %18 = vector.broadcast %13 : vector<1x512xf32> to vector<8x512xf32>
    %19 = arith.addf %17, %18 : vector<8x512xf32>
    %20 = arith.maximumf %16, %19 : vector<8x512xf32>
    %21 = arith.maximumf %11, %20 : vector<8x512xf32>
    %c4 = arith.constant 4 : index
    %c0_7 = arith.constant 0 : index
    %22 = vector.load %arg2[%c4, %c0_7] : memref<6x512xf32, #tpu.memory_space<vmem>>, vector<1x512xf32>
    %c5 = arith.constant 5 : index
    %c0_8 = arith.constant 0 : index
    %23 = vector.load %arg2[%c5, %c0_8] : memref<6x512xf32, #tpu.memory_space<vmem>>, vector<1x512xf32>
    %c64_i32 = arith.constant 64 : i32
    %24 = tpu.dynamic_rotate %21 by %c64_i32 dim 1 : vector<8x512xf32>, i32 -> vector<8x512xf32>
    %25 = vector.broadcast %22 : vector<1x512xf32> to vector<8x512xf32>
    %26 = arith.addf %24, %25 : vector<8x512xf32>
    %c448_i32 = arith.constant 448 : i32
    %27 = tpu.dynamic_rotate %21 by %c448_i32 dim 1 : vector<8x512xf32>, i32 -> vector<8x512xf32>
    %28 = vector.broadcast %23 : vector<1x512xf32> to vector<8x512xf32>
    %29 = arith.addf %27, %28 : vector<8x512xf32>
    %30 = arith.maximumf %26, %29 : vector<8x512xf32>
    %31 = arith.maximumf %21, %30 : vector<8x512xf32>
    %c0_9 = arith.constant 0 : index
    %c0_10 = arith.constant 0 : index
    %32 = vector.load %arg2[%c0_9, %c0_10] : memref<6x512xf32, #tpu.memory_space<vmem>>, vector<1x512xf32>
    %c1_11 = arith.constant 1 : index
    %c0_12 = arith.constant 0 : index
    %33 = vector.load %arg2[%c1_11, %c0_12] : memref<6x512xf32, #tpu.memory_space<vmem>>, vector<1x512xf32>
    %c1_i32_13 = arith.constant 1 : i32
    %34 = tpu.dynamic_rotate %31 by %c1_i32_13 dim 1 : vector<8x512xf32>, i32 -> vector<8x512xf32>
    %35 = vector.broadcast %32 : vector<1x512xf32> to vector<8x512xf32>
    %36 = arith.addf %34, %35 : vector<8x512xf32>
    %c511_i32_14 = arith.constant 511 : i32
    %37 = tpu.dynamic_rotate %31 by %c511_i32_14 dim 1 : vector<8x512xf32>, i32 -> vector<8x512xf32>
    %38 = vector.broadcast %33 : vector<1x512xf32> to vector<8x512xf32>
    %39 = arith.addf %37, %38 : vector<8x512xf32>
    %40 = arith.maximumf %36, %39 : vector<8x512xf32>
    %41 = arith.maximumf %31, %40 : vector<8x512xf32>
    %c2_15 = arith.constant 2 : index
    %c0_16 = arith.constant 0 : index
    %42 = vector.load %arg2[%c2_15, %c0_16] : memref<6x512xf32, #tpu.memory_space<vmem>>, vector<1x512xf32>
    %c3_17 = arith.constant 3 : index
    %c0_18 = arith.constant 0 : index
    %43 = vector.load %arg2[%c3_17, %c0_18] : memref<6x512xf32, #tpu.memory_space<vmem>>, vector<1x512xf32>
    %c8_i32_19 = arith.constant 8 : i32
    %44 = tpu.dynamic_rotate %41 by %c8_i32_19 dim 1 : vector<8x512xf32>, i32 -> vector<8x512xf32>
    %45 = vector.broadcast %42 : vector<1x512xf32> to vector<8x512xf32>
    %46 = arith.addf %44, %45 : vector<8x512xf32>
    %c504_i32_20 = arith.constant 504 : i32
    %47 = tpu.dynamic_rotate %41 by %c504_i32_20 dim 1 : vector<8x512xf32>, i32 -> vector<8x512xf32>
    %48 = vector.broadcast %43 : vector<1x512xf32> to vector<8x512xf32>
    %49 = arith.addf %47, %48 : vector<8x512xf32>
    %50 = arith.maximumf %46, %49 : vector<8x512xf32>
    %51 = arith.maximumf %41, %50 : vector<8x512xf32>
    %c4_21 = arith.constant 4 : index
    %c0_22 = arith.constant 0 : index
    %52 = vector.load %arg2[%c4_21, %c0_22] : memref<6x512xf32, #tpu.memory_space<vmem>>, vector<1x512xf32>
    %c5_23 = arith.constant 5 : index
    %c0_24 = arith.constant 0 : index
    %53 = vector.load %arg2[%c5_23, %c0_24] : memref<6x512xf32, #tpu.memory_space<vmem>>, vector<1x512xf32>
    %c64_i32_25 = arith.constant 64 : i32
    %54 = tpu.dynamic_rotate %51 by %c64_i32_25 dim 1 : vector<8x512xf32>, i32 -> vector<8x512xf32>
    %55 = vector.broadcast %52 : vector<1x512xf32> to vector<8x512xf32>
    %56 = arith.addf %54, %55 : vector<8x512xf32>
    %c448_i32_26 = arith.constant 448 : i32
    %57 = tpu.dynamic_rotate %51 by %c448_i32_26 dim 1 : vector<8x512xf32>, i32 -> vector<8x512xf32>
    %58 = vector.broadcast %53 : vector<1x512xf32> to vector<8x512xf32>
    %59 = arith.addf %57, %58 : vector<8x512xf32>
    %60 = arith.maximumf %56, %59 : vector<8x512xf32>
    %61 = arith.maximumf %51, %60 : vector<8x512xf32>
    %c0_27 = arith.constant 0 : index
    %c0_28 = arith.constant 0 : index
    %62 = vector.load %arg3[%c0_27, %c0_28] : memref<16x8xf32, #tpu.memory_space<vmem>>, vector<16x8xf32>
    %cst = arith.constant dense<0.000000e+00> : vector<16x512xf32>
    %63 = tpu.matmul %62, %1, %cst {dimension_numbers = #tpu.dot_dimension_numbers<[1], [0], [0], [1], [0, 0, 1, 1], [], []>} : vector<16x8xf32>, vector<8x512xf32>, vector<16x512xf32> -> vector<16x512xf32>
    %c0_29 = arith.constant 0 : index
    %c0_30 = arith.constant 0 : index
    %64 = vector.load %arg4[%c0_29, %c0_30] : memref<16x8xf32, #tpu.memory_space<vmem>>, vector<16x8xf32>
    %cst_31 = arith.constant dense<0.000000e+00> : vector<16x512xf32>
    %65 = tpu.matmul %64, %31, %cst_31 {dimension_numbers = #tpu.dot_dimension_numbers<[1], [0], [0], [1], [0, 0, 1, 1], [], []>} : vector<16x8xf32>, vector<8x512xf32>, vector<16x512xf32> -> vector<16x512xf32>
    %66 = arith.addf %63, %65 : vector<16x512xf32>
    %c0_32 = arith.constant 0 : index
    %c0_33 = arith.constant 0 : index
    %67 = vector.load %arg5[%c0_32, %c0_33] : memref<16x8xf32, #tpu.memory_space<vmem>>, vector<16x8xf32>
    %cst_34 = arith.constant dense<0.000000e+00> : vector<16x512xf32>
    %68 = tpu.matmul %67, %61, %cst_34 {dimension_numbers = #tpu.dot_dimension_numbers<[1], [0], [0], [1], [0, 0, 1, 1], [], []>} : vector<16x8xf32>, vector<8x512xf32>, vector<16x512xf32> -> vector<16x512xf32>
    %69 = arith.addf %66, %68 : vector<16x512xf32>
    %c0_35 = arith.constant 0 : index
    %c0_36 = arith.constant 0 : index
    %70 = vector.load %arg6[%c0_35, %c0_36] : memref<16x1xf32, #tpu.memory_space<vmem>>, vector<16x1xf32>
    %71 = vector.broadcast %70 : vector<16x1xf32> to vector<16x512xf32>
    %72 = arith.addf %69, %71 : vector<16x512xf32>
    %c0_37 = arith.constant 0 : index
    %c0_38 = arith.constant 0 : index
    %c0_39 = arith.constant 0 : index
    %73 = vector.load %arg7[%c0_37, %c0_38, %c0_39] : memref<1x16x512xf32, #tpu.memory_space<vmem>>, vector<1x16x512xf32>
    %74 = vector.shape_cast %73 : vector<1x16x512xf32> to vector<16x512xf32>
    %75 = vector.shape_cast %72 : vector<16x512xf32> to vector<1x16x512xf32>
    tpu.vector_store %arg7[%c0_37, %c0_38, %c0_39], %75 {strides = array<i32>} : memref<1x16x512xf32, #tpu.memory_space<vmem>>, vector<1x16x512xf32>,
    return
  }
  func.func @transform_0(%arg0: i32) -> (i32, i32, i32) {
    %c0_i32 = arith.constant 0 : i32
    %c0_i32_0 = arith.constant 0 : i32
    %c0_i32_1 = arith.constant 0 : i32
    return %arg0, %c0_i32, %c0_i32_0 : i32, i32, i32
  }
  func.func @transform_1(%arg0: i32) -> (i32, i32) {
    %c0_i32 = arith.constant 0 : i32
    %c0_i32_0 = arith.constant 0 : i32
    %c0_i32_1 = arith.constant 0 : i32
    return %c0_i32, %c0_i32_0 : i32, i32
  }
  func.func @transform_2(%arg0: i32) -> (i32, i32) {
    %c0_i32 = arith.constant 0 : i32
    %c0_i32_0 = arith.constant 0 : i32
    %c0_i32_1 = arith.constant 0 : i32
    return %c0_i32, %c0_i32_0 : i32, i32
  }
  func.func @transform_3(%arg0: i32) -> (i32, i32) {
    %c0_i32 = arith.constant 0 : i32
    %c0_i32_0 = arith.constant 0 : i32
    %c0_i32_1 = arith.constant 0 : i32
    return %c0_i32, %c0_i32_0 : i32, i32
  }
  func.func @transform_4(%arg0: i32) -> (i32, i32) {
    %c0_i32 = arith.constant 0 : i32
    %c0_i32_0 = arith.constant 0 : i32
    %c0_i32_1 = arith.constant 0 : i32
    return %c0_i32, %c0_i32_0 : i32, i32
  }
  func.func @transform_5(%arg0: i32) -> (i32, i32) {
    %c0_i32 = arith.constant 0 : i32
    %c0_i32_0 = arith.constant 0 : i32
    %c0_i32_1 = arith.constant 0 : i32
    return %c0_i32, %c0_i32_0 : i32, i32
  }
  func.func @transform_6(%arg0: i32) -> (i32, i32, i32) {
    %c0_i32 = arith.constant 0 : i32
    %c0_i32_0 = arith.constant 0 : i32
    %c0_i32_1 = arith.constant 0 : i32
    return %arg0, %c0_i32, %c0_i32_0 : i32, i32, i32
  }
}

</mosaic_0001>

<llo_original>
// kernel: spp_forward.1
$region0: #{spp_forward.1}
  #allocation0 [shape = 'u32[]', space=smem, size = 0x4, offset = 0x4, fixed_abs, tag = 'smem constant byte address 0x4 - core index']
  #allocation1 [shape = 'u32[144,128]{1,0:T(1,128)}', space=vmem, size = 0x12000, scoped, tag = 'internal scratch']
  %s0 = inlined_call_operand.vmem [shape: f32[1,8,512], index: 0, kind: input, shape index: {}]
  %s1 = inlined_call_operand.vmem [shape: f32[6,512], index: 1, kind: input, shape index: {}]
  %s2 = inlined_call_operand.vmem [shape: f32[16,8], index: 2, kind: input, shape index: {}]
  %s3 = inlined_call_operand.vmem [shape: f32[16,8], index: 3, kind: input, shape index: {}]
  %s4 = inlined_call_operand.vmem [shape: f32[16,8], index: 4, kind: input, shape index: {}]
  %s5 = inlined_call_operand.vmem [shape: f32[16,1], index: 5, kind: input, shape index: {}]
  %s6 = inlined_call_operand.vmem [shape: f32[1,16,512], index: 6, kind: output, shape index: {}]
  %s7 = sld [smem:[#allocation0]]
  $region34: #{spp_forward.1} parent=0
    _
  %s9 = ssub.s32 1, %s7
  %s10 = scalar_select 0, %s9, %s7
  // Predicated region
  $region2: #{spp_forward.1} parent=0 // pred_check
    _
  $region3: #{spp_forward.1} parent=0 // pred_check_branch
    %12 = sbr.rel (0) target = $region5
  $region4: #{spp_forward.1} parent=0 // pred_region
    _
  $region5: #{spp_forward.1} parent=0 // pred_fallthru
    _
  // Predicated region
  $region6: #{spp_forward.1} parent=0 // pred_check
    _
  $region7: #{spp_forward.1} parent=0 // pred_check_branch
    %14 = sbr.rel (0) target = $region9
  $region8: #{spp_forward.1} parent=0 // pred_region
    _
  $region9: #{spp_forward.1} parent=0 // pred_fallthru
    _
  // Predicated region
  $region10: #{spp_forward.1} parent=0 // pred_check
    _
  $region11: #{spp_forward.1} parent=0 // pred_check_branch
    %16 = sbr.rel (0) target = $region13
  $region12: #{spp_forward.1} parent=0 // pred_region
    _
  $region13: #{spp_forward.1} parent=0 // pred_fallthru
    _
  // Predicated region
  $region14: #{spp_forward.1} parent=0 // pred_check
    _
  $region15: #{spp_forward.1} parent=0 // pred_check_branch
    %18 = sbr.rel (0) target = $region17
  $region16: #{spp_forward.1} parent=0 // pred_region
    _
  $region17: #{spp_forward.1} parent=0 // pred_fallthru
    _
  // Predicated region
  $region18: #{spp_forward.1} parent=0 // pred_check
    _
  $region19: #{spp_forward.1} parent=0 // pred_check_branch
    %20 = sbr.rel (0) target = $region21
  $region20: #{spp_forward.1} parent=0 // pred_region
    _
  $region21: #{spp_forward.1} parent=0 // pred_fallthru
    _
  // Predicated region
  $region22: #{spp_forward.1} parent=0 // pred_check
    _
  $region23: #{spp_forward.1} parent=0 // pred_check_branch
    %22 = sbr.rel (0) target = $region25
  $region24: #{spp_forward.1} parent=0 // pred_region
    _
  $region25: #{spp_forward.1} parent=0 // pred_fallthru
    _
  %v23 = vld [vmem:[%s0] sm:$0xff]
  %v24 = vld [vmem:[%s0 + $0x8] sm:$0xff]
  %v25 = vld [vmem:[%s0 + $0x10] sm:$0xff]
  %v26 = vld [vmem:[%s0 + $0x18] sm:$0xff]
  %v27 = vld [vmem:[%s1] ss:$8 sm:$0xf]
  %s28 = scalar_lea.vmem %s1, 1
  %v29 = vld [vmem:[%s28] ss:$8 sm:$0xf]
  %30 = vrot.lane.b32.xlu0 %v23, 1
  %v31 = vpop.permute.xlu0 %30
  %32 = vrot.lane.b32.xlu0 %v24, 1
  %v33 = vpop.permute.xlu0 %32
  %34 = vrot.lane.b32.xlu0 %v25, 1
  %v35 = vpop.permute.xlu0 %34
  %36 = vrot.lane.b32.xlu0 %v26, 1
  %v37 = vpop.permute.xlu0 %36
  %v38 = vlaneseq
  %v39 = vand.u32 %v38, 127
  %vm40 = vcmp.lt.s32.totalorder %v39, 1
  %v41 = vsel %vm40, %v35, %v37
  %v42 = vsel %vm40, %v33, %v35
  %v43 = vsel %vm40, %v31, %v33
  %v44 = vsel %vm40, %v37, %v31
  %v46 = vlaneseq
  %v47 = vshrl.u32 %v46, 7
  %v48 = vsub.s32 0, %v47
  %v49 = vrot.slane %v27, %v48
  %v50 = vlaneseq
  %v51 = vshrl.u32 %v50, 7
  %v52 = vsub.s32 1, %v51
  %v53 = vrot.slane %v27, %v52
  %v54 = vlaneseq
  %v55 = vshrl.u32 %v54, 7
  %v56 = vsub.s32 2, %v55
  %v57 = vrot.slane %v27, %v56
  %v58 = vlaneseq
  %v59 = vshrl.u32 %v58, 7
  %v60 = vsub.s32 3, %v59
  %v61 = vrot.slane %v27, %v60
  %v66 = vadd.f32 %v44, %v49
  %v67 = vadd.f32 %v43, %v53
  %v68 = vadd.f32 %v42, %v57
  %v69 = vadd.f32 %v41, %v61
  %70 = vrot.lane.b32.xlu0 %v23, 127
  %v71 = vpop.permute.xlu0 %70
  %72 = vrot.lane.b32.xlu0 %v24, 127
  %v73 = vpop.permute.xlu0 %72
  %74 = vrot.lane.b32.xlu0 %v25, 127
  %v75 = vpop.permute.xlu0 %74
  %76 = vrot.lane.b32.xlu0 %v26, 127
  %v77 = vpop.permute.xlu0 %76
  %vm78 = vcmp.lt.s32.totalorder %v39, 127
  %v79 = vsel %vm78, %v75, %v77
  %v80 = vsel %vm78, %v73, %v75
  %v81 = vsel %vm78, %v71, %v73
  %v82 = vsel %vm78, %v77, %v71
  %v84 = vlaneseq
  %v85 = vshrl.u32 %v84, 7
  %v86 = vsub.s32 0, %v85
  %v87 = vrot.slane %v29, %v86
  %v88 = vlaneseq
  %v89 = vshrl.u32 %v88, 7
  %v90 = vsub.s32 1, %v89
  %v91 = vrot.slane %v29, %v90
  %v92 = vlaneseq
  %v93 = vshrl.u32 %v92, 7
  %v94 = vsub.s32 2, %v93
  %v95 = vrot.slane %v29, %v94
  %v96 = vlaneseq
  %v97 = vshrl.u32 %v96, 7
  %v98 = vsub.s32 3, %v97
  %v99 = vrot.slane %v29, %v98
  %v104 = vadd.f32 %v81, %v87
  %v105 = vadd.f32 %v80, %v91
  %v106 = vadd.f32 %v79, %v95
  %v107 = vadd.f32 %v82, %v99
  %v108 = vmax.f32 %v66, %v104
  %v109 = vmax.f32 %v67, %v105
  %v110 = vmax.f32 %v68, %v106
  %v111 = vmax.f32 %v69, %v107
  %v112 = vmax.f32 %v23, %v108
  %v113 = vmax.f32 %v24, %v109
  %v114 = vmax.f32 %v25, %v110
  %v115 = vmax.f32 %v26, %v111
  %s116 = scalar_lea.vmem %s1, 2
  %v117 = vld [vmem:[%s116] ss:$8 sm:$0xf]
  %s118 = scalar_lea.vmem %s1, 3
  %v119 = vld [vmem:[%s118] ss:$8 sm:$0xf]
  %120 = vrot.lane.b32.xlu0 %v112, 8
  %v121 = vpop.permute.xlu0 %120
  %122 = vrot.lane.b32.xlu0 %v113, 8
  %v123 = vpop.permute.xlu0 %122
  %124 = vrot.lane.b32.xlu0 %v114, 8
  %v125 = vpop.permute.xlu0 %124
  %126 = vrot.lane.b32.xlu0 %v115, 8
  %v127 = vpop.permute.xlu0 %126
  %vm128 = vcmp.lt.s32.totalorder %v39, 8
  %v129 = vsel %vm128, %v125, %v127
  %v130 = vsel %vm128, %v123, %v125
  %v131 = vsel %vm128, %v121, %v123
  %v132 = vsel %vm128, %v127, %v121
  %v134 = vlaneseq
  %v135 = vshrl.u32 %v134, 7
  %v136 = vsub.s32 0, %v135
  %v137 = vrot.slane %v117, %v136
  %v138 = vlaneseq
  %v139 = vshrl.u32 %v138, 7
  %v140 = vsub.s32 1, %v139
  %v141 = vrot.slane %v117, %v140
  %v142 = vlaneseq
  %v143 = vshrl.u32 %v142, 7
  %v144 = vsub.s32 2, %v143
  %v145 = vrot.slane %v117, %v144
  %v146 = vlaneseq
  %v147 = vshrl.u32 %v146, 7
  %v148 = vsub.s32 3, %v147
  %v149 = vrot.slane %v117, %v148
  %v154 = vadd.f32 %v132, %v137
  %v155 = vadd.f32 %v131, %v141
  %v156 = vadd.f32 %v130, %v145
  %v157 = vadd.f32 %v129, %v149
  %158 = vrot.lane.b32.xlu0 %v112, 120
  %v159 = vpop.permute.xlu0 %158
  %160 = vrot.lane.b32.xlu0 %v113, 120
  %v161 = vpop.permute.xlu0 %160
  %162 = vrot.lane.b32.xlu0 %v114, 120
  %v163 = vpop.permute.xlu0 %162
  %164 = vrot.lane.b32.xlu0 %v115, 120
  %v165 = vpop.permute.xlu0 %164
  %vm166 = vcmp.lt.s32.totalorder %v39, 120
  %v167 = vsel %vm166, %v163, %v165
  %v168 = vsel %vm166, %v161, %v163
  %v169 = vsel %vm166, %v159, %v161
  %v170 = vsel %vm166, %v165, %v159
  %v172 = vlaneseq
  %v173 = vshrl.u32 %v172, 7
  %v174 = vsub.s32 0, %v173
  %v175 = vrot.slane %v119, %v174
  %v176 = vlaneseq
  %v177 = vshrl.u32 %v176, 7
  %v178 = vsub.s32 1, %v177
  %v179 = vrot.slane %v119, %v178
  %v180 = vlaneseq
  %v181 = vshrl.u32 %v180, 7
  %v182 = vsub.s32 2, %v181
  %v183 = vrot.slane %v119, %v182
  %v184 = vlaneseq
  %v185 = vshrl.u32 %v184, 7
  %v186 = vsub.s32 3, %v185
  %v187 = vrot.slane %v119, %v186
  %v192 = vadd.f32 %v169, %v175
  %v193 = vadd.f32 %v168, %v179
  %v194 = vadd.f32 %v167, %v183
  %v195 = vadd.f32 %v170, %v187
  %v196 = vmax.f32 %v154, %v192
  %v197 = vmax.f32 %v155, %v193
  %v198 = vmax.f32 %v156, %v194
  %v199 = vmax.f32 %v157, %v195
  %v200 = vmax.f32 %v112, %v196
  %v201 = vmax.f32 %v113, %v197
  %v202 = vmax.f32 %v114, %v198
  %v203 = vmax.f32 %v115, %v199
  %s204 = scalar_lea.vmem %s1, 4
  %v205 = vld [vmem:[%s204] ss:$8 sm:$0xf]
  %s206 = scalar_lea.vmem %s1, 5
  %v207 = vld [vmem:[%s206] ss:$8 sm:$0xf]
  %208 = vrot.lane.b32.xlu0 %v200, 64
  %v209 = vpop.permute.xlu0 %208
  %210 = vrot.lane.b32.xlu0 %v201, 64
  %v211 = vpop.permute.xlu0 %210
  %212 = vrot.lane.b32.xlu0 %v202, 64
  %v213 = vpop.permute.xlu0 %212
  %214 = vrot.lane.b32.xlu0 %v203, 64
  %v215 = vpop.permute.xlu0 %214
  %vm216 = vcmp.lt.s32.totalorder %v39, 64
  %v217 = vsel %vm216, %v213, %v215
  %v218 = vsel %vm216, %v211, %v213
  %v219 = vsel %vm216, %v209, %v211
  %v220 = vsel %vm216, %v215, %v209
  %v222 = vlaneseq
  %v223 = vshrl.u32 %v222, 7
  %v224 = vsub.s32 0, %v223
  %v225 = vrot.slane %v205, %v224
  %v226 = vlaneseq
  %v227 = vshrl.u32 %v226, 7
  %v228 = vsub.s32 1, %v227
  %v229 = vrot.slane %v205, %v228
  %v230 = vlaneseq
  %v231 = vshrl.u32 %v230, 7
  %v232 = vsub.s32 2, %v231
  %v233 = vrot.slane %v205, %v232
  %v234 = vlaneseq
  %v235 = vshrl.u32 %v234, 7
  %v236 = vsub.s32 3, %v235
  %v237 = vrot.slane %v205, %v236
  %v242 = vadd.f32 %v220, %v225
  %v243 = vadd.f32 %v219, %v229
  %v244 = vadd.f32 %v218, %v233
  %v245 = vadd.f32 %v217, %v237
  %v247 = vlaneseq
  %v248 = vshrl.u32 %v247, 7
  %v249 = vsub.s32 0, %v248
  %v250 = vrot.slane %v207, %v249
  %v251 = vlaneseq
  %v252 = vshrl.u32 %v251, 7
  %v253 = vsub.s32 1, %v252
  %v254 = vrot.slane %v207, %v253
  %v255 = vlaneseq
  %v256 = vshrl.u32 %v255, 7
  %v257 = vsub.s32 2, %v256
  %v258 = vrot.slane %v207, %v257
  %v259 = vlaneseq
  %v260 = vshrl.u32 %v259, 7
  %v261 = vsub.s32 3, %v260
  %v262 = vrot.slane %v207, %v261
  %v267 = vadd.f32 %v219, %v250
  %v268 = vadd.f32 %v218, %v254
  %v269 = vadd.f32 %v217, %v258
  %v270 = vadd.f32 %v220, %v262
  %v271 = vmax.f32 %v242, %v267
  %v272 = vmax.f32 %v243, %v268
  %v273 = vmax.f32 %v244, %v269
  %v274 = vmax.f32 %v245, %v270
  %v275 = vmax.f32 %v200, %v271
  %v276 = vmax.f32 %v201, %v272
  %v277 = vmax.f32 %v202, %v273
  %v278 = vmax.f32 %v203, %v274
  %279 = vrot.lane.b32.xlu0 %v275, 1
  %v280 = vpop.permute.xlu0 %279
  %281 = vrot.lane.b32.xlu0 %v276, 1
  %v282 = vpop.permute.xlu0 %281
  %283 = vrot.lane.b32.xlu0 %v277, 1
  %v284 = vpop.permute.xlu0 %283
  %285 = vrot.lane.b32.xlu0 %v278, 1
  %v286 = vpop.permute.xlu0 %285
  %v287 = vsel %vm40, %v284, %v286
  %v288 = vsel %vm40, %v282, %v284
  %v289 = vsel %vm40, %v280, %v282
  %v290 = vsel %vm40, %v286, %v280
  %v291 = vadd.f32 %v290, %v49
  %v292 = vadd.f32 %v289, %v53
  %v293 = vadd.f32 %v288, %v57
  %v294 = vadd.f32 %v287, %v61
  %295 = vrot.lane.b32.xlu0 %v275, 127
  %v296 = vpop.permute.xlu0 %295
  %297 = vrot.lane.b32.xlu0 %v276, 127
  %v298 = vpop.permute.xlu0 %297
  %299 = vrot.lane.b32.xlu0 %v277, 127
  %v300 = vpop.permute.xlu0 %299
  %301 = vrot.lane.b32.xlu0 %v278, 127
  %v302 = vpop.permute.xlu0 %301
  %v303 = vsel %vm78, %v300, %v302
  %v304 = vsel %vm78, %v298, %v300
  %v305 = vsel %vm78, %v296, %v298
  %v306 = vsel %vm78, %v302, %v296
  %v307 = vadd.f32 %v305, %v87
  %v308 = vadd.f32 %v304, %v91
  %v309 = vadd.f32 %v303, %v95
  %v310 = vadd.f32 %v306, %v99
  %v311 = vmax.f32 %v291, %v307
  %v312 = vmax.f32 %v292, %v308
  %v313 = vmax.f32 %v293, %v309
  %v314 = vmax.f32 %v294, %v310
  %v315 = vmax.f32 %v275, %v311
  %v316 = vmax.f32 %v276, %v312
  %v317 = vmax.f32 %v277, %v313
  %v318 = vmax.f32 %v278, %v314
  %319 = vrot.lane.b32.xlu0 %v315, 8
  %v320 = vpop.permute.xlu0 %319
  %321 = vrot.lane.b32.xlu0 %v316, 8
  %v322 = vpop.permute.xlu0 %321
  %323 = vrot.lane.b32.xlu0 %v317, 8
  %v324 = vpop.permute.xlu0 %323
  %325 = vrot.lane.b32.xlu0 %v318, 8
  %v326 = vpop.permute.xlu0 %325
  %v327 = vsel %vm128, %v324, %v326
  %v328 = vsel %vm128, %v322, %v324
  %v329 = vsel %vm128, %v320, %v322
  %v330 = vsel %vm128, %v326, %v320
  %v331 = vadd.f32 %v330, %v137
  %v332 = vadd.f32 %v329, %v141
  %v333 = vadd.f32 %v328, %v145
  %v334 = vadd.f32 %v327, %v149
  %335 = vrot.lane.b32.xlu0 %v315, 120
  %v336 = vpop.permute.xlu0 %335
  %337 = vrot.lane.b32.xlu0 %v316, 120
  %v338 = vpop.permute.xlu0 %337
  %339 = vrot.lane.b32.xlu0 %v317, 120
  %v340 = vpop.permute.xlu0 %339
  %341 = vrot.lane.b32.xlu0 %v318, 120
  %v342 = vpop.permute.xlu0 %341
  %v343 = vsel %vm166, %v340, %v342
  %v344 = vsel %vm166, %v338, %v340
  %v345 = vsel %vm166, %v336, %v338
  %v346 = vsel %vm166, %v342, %v336
  %v347 = vadd.f32 %v345, %v175
  %v348 = vadd.f32 %v344, %v179
  %v349 = vadd.f32 %v343, %v183
  %v350 = vadd.f32 %v346, %v187
  %v351 = vmax.f32 %v331, %v347
  %v352 = vmax.f32 %v332, %v348
  %v353 = vmax.f32 %v333, %v349
  %v354 = vmax.f32 %v334, %v350
  %v355 = vmax.f32 %v315, %v351
  %v356 = vmax.f32 %v316, %v352
  %v357 = vmax.f32 %v317, %v353
  %v358 = vmax.f32 %v318, %v354
  %359 = vrot.lane.b32.xlu0 %v355, 64
  %v360 = vpop.permute.xlu0 %359
  %361 = vrot.lane.b32.xlu0 %v356, 64
  %v362 = vpop.permute.xlu0 %361
  %363 = vrot.lane.b32.xlu0 %v357, 64
  %v364 = vpop.permute.xlu0 %363
  %365 = vrot.lane.b32.xlu0 %v358, 64
  %v366 = vpop.permute.xlu0 %365
  %v367 = vsel %vm216, %v364, %v366
  %v368 = vsel %vm216, %v362, %v364
  %v369 = vsel %vm216, %v360, %v362
  %v370 = vsel %vm216, %v366, %v360
  %v371 = vadd.f32 %v370, %v225
  %v372 = vadd.f32 %v369, %v229
  %v373 = vadd.f32 %v368, %v233
  %v374 = vadd.f32 %v367, %v237
  %v375 = vadd.f32 %v369, %v250
  %v376 = vadd.f32 %v368, %v254
  %v377 = vadd.f32 %v367, %v258
  %v378 = vadd.f32 %v370, %v262
  %v379 = vmax.f32 %v371, %v375
  %v380 = vmax.f32 %v372, %v376
  %v381 = vmax.f32 %v373, %v377
  %v382 = vmax.f32 %v374, %v378
  %v383 = vmax.f32 %v355, %v379
  %v384 = vmax.f32 %v356, %v380
  %v385 = vmax.f32 %v357, %v381
  %v386 = vmax.f32 %v358, %v382
  %v387 = vld [vmem:[%s2] sm:$0xff]
  %v388 = vld [vmem:[%s2 + $0x8] sm:$0xff]
  %v389 = vld [vmem:[%s3] sm:$0xff]
  %v390 = vld [vmem:[%s3 + $0x8] sm:$0xff]
  %vm391 = vcmask 64512
  %v393 = vsel %vm391, %v389, 0
  %v396 = vsel %vm391, %v390, 0
  %398 = vmatprep.subr.mxu0 0.0
  %399 = vmatpush1.msra.mxu0 0.0
  %400 = vmatprep.subr.mxu0 0.0
  %401 = vmatpush1.msra.mxu0 0.0
  %402 = vmatprep.subr.mxu0 0.0
  %403 = vmatpush1.msra.mxu0 0.0
  %404 = vmatprep.subr.mxu0 0.0
  %405 = vmatpush1.msra.mxu0 0.0
  %406 = vmatprep.subr.mxu0 0.0
  %407 = vmatpush1.msra.mxu0 0.0
  %408 = vmatprep.subr.mxu0 0.0
  %409 = vmatpush1.msra.mxu0 0.0
  %410 = vmatprep.subr.mxu0 0.0
  %411 = vmatpush1.msra.mxu0 0.0
  %412 = vmatprep.subr.mxu0 0.0
  %413 = vmatpush1.msra.mxu0 0.0
  %414 = vmatprep.subr.mxu0 0.0
  %415 = vmatpush1.msra.mxu0 0.0
  %416 = vmatprep.subr.mxu0 0.0
  %417 = vmatpush1.msra.mxu0 0.0
  %418 = vmatprep.subr.mxu0 0.0
  %419 = vmatpush1.msra.mxu0 0.0
  %420 = vmatprep.subr.mxu0 0.0
  %421 = vmatpush1.msra.mxu0 0.0
  %422 = vmatprep.subr.mxu0 0.0
  %423 = vmatpush1.msra.mxu0 0.0
  %424 = vmatprep.subr.mxu0 0.0
  %425 = vmatpush1.msra.mxu0 0.0
  %426 = vmatprep.subr.mxu0 0.0
  %427 = vmatpush1.msra.mxu0 0.0
  %428 = vmatprep.subr.mxu0 %v276
  %429 = vmatpush1.msra.mxu0 %v275
  %430 = vmatprep.subr.mxu0 0.0
  %431 = vmatpush2.msra.mxu0 0.0
  %432 = vmatprep.subr.mxu0 0.0
  %433 = vmatpush2.msra.mxu0 0.0
  %434 = vmatprep.subr.mxu0 0.0
  %435 = vmatpush2.msra.mxu0 0.0
  %436 = vmatprep.subr.mxu0 0.0
  %437 = vmatpush2.msra.mxu0 0.0
  %438 = vmatprep.subr.mxu0 0.0
  %439 = vmatpush2.msra.mxu0 0.0
  %440 = vmatprep.subr.mxu0 0.0
  %441 = vmatpush2.msra.mxu0 0.0
  %442 = vmatprep.subr.mxu0 0.0
  %443 = vmatpush2.msra.mxu0 0.0
  %444 = vmatprep.subr.mxu0 0.0
  %445 = vmatpush2.msra.mxu0 0.0
  %446 = vmatprep.subr.mxu0 0.0
  %447 = vmatpush2.msra.mxu0 0.0
  %448 = vmatprep.subr.mxu0 0.0
  %449 = vmatpush2.msra.mxu0 0.0
  %450 = vmatprep.subr.mxu0 0.0
  %451 = vmatpush2.msra.mxu0 0.0
  %452 = vmatprep.subr.mxu0 0.0
  %453 = vmatpush2.msra.mxu0 0.0
  %454 = vmatprep.subr.mxu0 0.0
  %455 = vmatpush2.msra.mxu0 0.0
  %456 = vmatprep.subr.mxu0 0.0
  %457 = vmatpush2.msra.mxu0 0.0
  %458 = vmatprep.subr.mxu0 0.0
  %459 = vmatpush2.msra.mxu0 0.0
  %460 = vmatprep.subr.mxu0 0.0
  %461 = vmatpush2.msra.mxu0 0.0
  %462 = vmatprep.mubr.f32.mxu0 0.0
  %463 = vmatmul.mubr.f32.gmra.mxu0 %v393
  %v464 = vpop.f32.mrf.mxu0
  %v465 = vadd.f32 0.0, %v464
  %v466 = vpop.f32.mrf.mxu0
  %v467 = vadd.f32 0.0, %v466
  %468 = vmatprep.mubr.f32.mxu0 0.0
  %469 = vmatmul.mubr.f32.gmra.mxu0 %v396
  %v470 = vpop.f32.mrf.mxu0
  %v471 = vadd.f32 0.0, %v470
  %v472 = vpop.f32.mrf.mxu0
  %v473 = vadd.f32 0.0, %v472
  %474 = vdwg.mxu0
  %475 = vmatprep.subr.mxu0 0.0
  %476 = vmatpush1.msra.mxu0 0.0
  %477 = vmatprep.subr.mxu0 0.0
  %478 = vmatpush1.msra.mxu0 0.0
  %479 = vmatprep.subr.mxu0 0.0
  %480 = vmatpush1.msra.mxu0 0.0
  %481 = vmatprep.subr.mxu0 0.0
  %482 = vmatpush1.msra.mxu0 0.0
  %483 = vmatprep.subr.mxu0 0.0
  %484 = vmatpush1.msra.mxu0 0.0
  %485 = vmatprep.subr.mxu0 0.0
  %486 = vmatpush1.msra.mxu0 0.0
  %487 = vmatprep.subr.mxu0 0.0
  %488 = vmatpush1.msra.mxu0 0.0
  %489 = vmatprep.subr.mxu0 0.0
  %490 = vmatpush1.msra.mxu0 0.0
  %491 = vmatprep.subr.mxu0 0.0
  %492 = vmatpush1.msra.mxu0 0.0
  %493 = vmatprep.subr.mxu0 0.0
  %494 = vmatpush1.msra.mxu0 0.0
  %495 = vmatprep.subr.mxu0 0.0
  %496 = vmatpush1.msra.mxu0 0.0
  %497 = vmatprep.subr.mxu0 0.0
  %498 = vmatpush1.msra.mxu0 0.0
  %499 = vmatprep.subr.mxu0 0.0
  %500 = vmatpush1.msra.mxu0 0.0
  %501 = vmatprep.subr.mxu0 0.0
  %502 = vmatpush1.msra.mxu0 0.0
  %503 = vmatprep.subr.mxu0 0.0
  %504 = vmatpush1.msra.mxu0 0.0
  %505 = vmatprep.subr.mxu0 %v278
  %506 = vmatpush1.msra.mxu0 %v277
  %507 = vmatprep.subr.mxu0 0.0
  %508 = vmatpush2.msra.mxu0 0.0
  %509 = vmatprep.subr.mxu0 0.0
  %510 = vmatpush2.msra.mxu0 0.0
  %511 = vmatprep.subr.mxu0 0.0
  %512 = vmatpush2.msra.mxu0 0.0
  %513 = vmatprep.subr.mxu0 0.0
  %514 = vmatpush2.msra.mxu0 0.0
  %515 = vmatprep.subr.mxu0 0.0
  %516 = vmatpush2.msra.mxu0 0.0
  %517 = vmatprep.subr.mxu0 0.0
  %518 = vmatpush2.msra.mxu0 0.0
  %519 = vmatprep.subr.mxu0 0.0
  %520 = vmatpush2.msra.mxu0 0.0
  %521 = vmatprep.subr.mxu0 0.0
  %522 = vmatpush2.msra.mxu0 0.0
  %523 = vmatprep.subr.mxu0 0.0
  %524 = vmatpush2.msra.mxu0 0.0
  %525 = vmatprep.subr.mxu0 0.0
  %526 = vmatpush2.msra.mxu0 0.0
  %527 = vmatprep.subr.mxu0 0.0
  %528 = vmatpush2.msra.mxu0 0.0
  %529 = vmatprep.subr.mxu0 0.0
  %530 = vmatpush2.msra.mxu0 0.0
  %531 = vmatprep.subr.mxu0 0.0
  %532 = vmatpush2.msra.mxu0 0.0
  %533 = vmatprep.subr.mxu0 0.0
  %534 = vmatpush2.msra.mxu0 0.0
  %535 = vmatprep.subr.mxu0 0.0
  %536 = vmatpush2.msra.mxu0 0.0
  %537 = vmatprep.subr.mxu0 0.0
  %538 = vmatpush2.msra.mxu0 0.0
  %539 = vmatprep.mubr.f32.mxu0 0.0
  %540 = vmatmul.mubr.f32.gmra.mxu0 %v393
  %v541 = vpop.f32.mrf.mxu0
  %v542 = vadd.f32 0.0, %v541
  %v543 = vpop.f32.mrf.mxu0
  %v544 = vadd.f32 0.0, %v543
  %545 = vmatprep.mubr.f32.mxu0 0.0
  %546 = vmatmul.mubr.f32.gmra.mxu0 %v396
  %v547 = vpop.f32.mrf.mxu0
  %v548 = vadd.f32 0.0, %v547
  %v549 = vpop.f32.mrf.mxu0
  %v550 = vadd.f32 0.0, %v549
  %551 = vdwg.mxu0
  %v553 = vsel %vm391, %v387, 0
  %v556 = vsel %vm391, %v388, 0
  %558 = vmatprep.subr.mxu0 0.0
  %559 = vmatpush1.msra.mxu0 0.0
  %560 = vmatprep.subr.mxu0 0.0
  %561 = vmatpush1.msra.mxu0 0.0
  %562 = vmatprep.subr.mxu0 0.0
  %563 = vmatpush1.msra.mxu0 0.0
  %564 = vmatprep.subr.mxu0 0.0
  %565 = vmatpush1.msra.mxu0 0.0
  %566 = vmatprep.subr.mxu0 0.0
  %567 = vmatpush1.msra.mxu0 0.0
  %568 = vmatprep.subr.mxu0 0.0
  %569 = vmatpush1.msra.mxu0 0.0
  %570 = vmatprep.subr.mxu0 0.0
  %571 = vmatpush1.msra.mxu0 0.0
  %572 = vmatprep.subr.mxu0 0.0
  %573 = vmatpush1.msra.mxu0 0.0
  %574 = vmatprep.subr.mxu0 0.0
  %575 = vmatpush1.msra.mxu0 0.0
  %576 = vmatprep.subr.mxu0 0.0
  %577 = vmatpush1.msra.mxu0 0.0
  %578 = vmatprep.subr.mxu0 0.0
  %579 = vmatpush1.msra.mxu0 0.0
  %580 = vmatprep.subr.mxu0 0.0
  %581 = vmatpush1.msra.mxu0 0.0
  %582 = vmatprep.subr.mxu0 0.0
  %583 = vmatpush1.msra.mxu0 0.0
  %584 = vmatprep.subr.mxu0 0.0
  %585 = vmatpush1.msra.mxu0 0.0
  %586 = vmatprep.subr.mxu0 0.0
  %587 = vmatpush1.msra.mxu0 0.0
  %588 = vmatprep.subr.mxu0 %v24
  %589 = vmatpush1.msra.mxu0 %v23
  %590 = vmatprep.subr.mxu0 0.0
  %591 = vmatpush2.msra.mxu0 0.0
  %592 = vmatprep.subr.mxu0 0.0
  %593 = vmatpush2.msra.mxu0 0.0
  %594 = vmatprep.subr.mxu0 0.0
  %595 = vmatpush2.msra.mxu0 0.0
  %596 = vmatprep.subr.mxu0 0.0
  %597 = vmatpush2.msra.mxu0 0.0
  %598 = vmatprep.subr.mxu0 0.0
  %599 = vmatpush2.msra.mxu0 0.0
  %600 = vmatprep.subr.mxu0 0.0
  %601 = vmatpush2.msra.mxu0 0.0
  %602 = vmatprep.subr.mxu0 0.0
  %603 = vmatpush2.msra.mxu0 0.0
  %604 = vmatprep.subr.mxu0 0.0
  %605 = vmatpush2.msra.mxu0 0.0
  %606 = vmatprep.subr.mxu0 0.0
  %607 = vmatpush2.msra.mxu0 0.0
  %608 = vmatprep.subr.mxu0 0.0
  %609 = vmatpush2.msra.mxu0 0.0
  %610 = vmatprep.subr.mxu0 0.0
  %611 = vmatpush2.msra.mxu0 0.0
  %612 = vmatprep.subr.mxu0 0.0
  %613 = vmatpush2.msra.mxu0 0.0
  %614 = vmatprep.subr.mxu0 0.0
  %615 = vmatpush2.msra.mxu0 0.0
  %616 = vmatprep.subr.mxu0 0.0
  %617 = vmatpush2.msra.mxu0 0.0
  %618 = vmatprep.subr.mxu0 0.0
  %619 = vmatpush2.msra.mxu0 0.0
  %620 = vmatprep.subr.mxu0 0.0
  %621 = vmatpush2.msra.mxu0 0.0
  %622 = vmatprep.mubr.f32.mxu0 0.0
  %623 = vmatmul.mubr.f32.gmra.mxu0 %v553
  %v624 = vpop.f32.mrf.mxu0
  %v625 = vadd.f32 %v465, %v624
  %v626 = vpop.f32.mrf.mxu0
  %v627 = vadd.f32 %v467, %v626
  %628 = vmatprep.mubr.f32.mxu0 0.0
  %629 = vmatmul.mubr.f32.gmra.mxu0 %v556
  %v630 = vpop.f32.mrf.mxu0
  %v631 = vadd.f32 %v471, %v630
  %v632 = vpop.f32.mrf.mxu0
  %v633 = vadd.f32 %v473, %v632
  %634 = vdwg.mxu0
  %635 = vmatprep.subr.mxu0 0.0
  %636 = vmatpush1.msra.mxu0 0.0
  %637 = vmatprep.subr.mxu0 0.0
  %638 = vmatpush1.msra.mxu0 0.0
  %639 = vmatprep.subr.mxu0 0.0
  %640 = vmatpush1.msra.mxu0 0.0
  %641 = vmatprep.subr.mxu0 0.0
  %642 = vmatpush1.msra.mxu0 0.0
  %643 = vmatprep.subr.mxu0 0.0
  %644 = vmatpush1.msra.mxu0 0.0
  %645 = vmatprep.subr.mxu0 0.0
  %646 = vmatpush1.msra.mxu0 0.0
  %647 = vmatprep.subr.mxu0 0.0
  %648 = vmatpush1.msra.mxu0 0.0
  %649 = vmatprep.subr.mxu0 0.0
  %650 = vmatpush1.msra.mxu0 0.0
  %651 = vmatprep.subr.mxu0 0.0
  %652 = vmatpush1.msra.mxu0 0.0
  %653 = vmatprep.subr.mxu0 0.0
  %654 = vmatpush1.msra.mxu0 0.0
  %655 = vmatprep.subr.mxu0 0.0
  %656 = vmatpush1.msra.mxu0 0.0
  %657 = vmatprep.subr.mxu0 0.0
  %658 = vmatpush1.msra.mxu0 0.0
  %659 = vmatprep.subr.mxu0 0.0
  %660 = vmatpush1.msra.mxu0 0.0
  %661 = vmatprep.subr.mxu0 0.0
  %662 = vmatpush1.msra.mxu0 0.0
  %663 = vmatprep.subr.mxu0 0.0
  %664 = vmatpush1.msra.mxu0 0.0
  %665 = vmatprep.subr.mxu0 %v26
  %666 = vmatpush1.msra.mxu0 %v25
  %667 = vmatprep.subr.mxu0 0.0
  %668 = vmatpush2.msra.mxu0 0.0
  %669 = vmatprep.subr.mxu0 0.0
  %670 = vmatpush2.msra.mxu0 0.0
  %671 = vmatprep.subr.mxu0 0.0
  %672 = vmatpush2.msra.mxu0 0.0
  %673 = vmatprep.subr.mxu0 0.0
  %674 = vmatpush2.msra.mxu0 0.0
  %675 = vmatprep.subr.mxu0 0.0
  %676 = vmatpush2.msra.mxu0 0.0
  %677 = vmatprep.subr.mxu0 0.0
  %678 = vmatpush2.msra.mxu0 0.0
  %679 = vmatprep.subr.mxu0 0.0
  %680 = vmatpush2.msra.mxu0 0.0
  %681 = vmatprep.subr.mxu0 0.0
  %682 = vmatpush2.msra.mxu0 0.0
  %683 = vmatprep.subr.mxu0 0.0
  %684 = vmatpush2.msra.mxu0 0.0
  %685 = vmatprep.subr.mxu0 0.0
  %686 = vmatpush2.msra.mxu0 0.0
  %687 = vmatprep.subr.mxu0 0.0
  %688 = vmatpush2.msra.mxu0 0.0
  %689 = vmatprep.subr.mxu0 0.0
  %690 = vmatpush2.msra.mxu0 0.0
  %691 = vmatprep.subr.mxu0 0.0
  %692 = vmatpush2.msra.mxu0 0.0
  %693 = vmatprep.subr.mxu0 0.0
  %694 = vmatpush2.msra.mxu0 0.0
  %695 = vmatprep.subr.mxu0 0.0
  %696 = vmatpush2.msra.mxu0 0.0
  %697 = vmatprep.subr.mxu0 0.0
  %698 = vmatpush2.msra.mxu0 0.0
  %699 = vmatprep.mubr.f32.mxu0 0.0
  %700 = vmatmul.mubr.f32.gmra.mxu0 %v553
  %v701 = vpop.f32.mrf.mxu0
  %v702 = vadd.f32 %v542, %v701
  %v703 = vpop.f32.mrf.mxu0
  %v704 = vadd.f32 %v544, %v703
  %705 = vmatprep.mubr.f32.mxu0 0.0
  %706 = vmatmul.mubr.f32.gmra.mxu0 %v556
  %v707 = vpop.f32.mrf.mxu0
  %v708 = vadd.f32 %v548, %v707
  %v709 = vpop.f32.mrf.mxu0
  %v710 = vadd.f32 %v550, %v709
  %711 = vdwg.mxu0
  %v712 = vld [vmem:[%s4] sm:$0xff]
  %v713 = vld [vmem:[%s4 + $0x8] sm:$0xff]
  %v715 = vsel %vm391, %v712, 0
  %v718 = vsel %vm391, %v713, 0
  %720 = vmatprep.subr.mxu0 0.0
  %721 = vmatpush1.msra.mxu0 0.0
  %722 = vmatprep.subr.mxu0 0.0
  %723 = vmatpush1.msra.mxu0 0.0
  %724 = vmatprep.subr.mxu0 0.0
  %725 = vmatpush1.msra.mxu0 0.0
  %726 = vmatprep.subr.mxu0 0.0
  %727 = vmatpush1.msra.mxu0 0.0
  %728 = vmatprep.subr.mxu0 0.0
  %729 = vmatpush1.msra.mxu0 0.0
  %730 = vmatprep.subr.mxu0 0.0
  %731 = vmatpush1.msra.mxu0 0.0
  %732 = vmatprep.subr.mxu0 0.0
  %733 = vmatpush1.msra.mxu0 0.0
  %734 = vmatprep.subr.mxu0 0.0
  %735 = vmatpush1.msra.mxu0 0.0
  %736 = vmatprep.subr.mxu0 0.0
  %737 = vmatpush1.msra.mxu0 0.0
  %738 = vmatprep.subr.mxu0 0.0
  %739 = vmatpush1.msra.mxu0 0.0
  %740 = vmatprep.subr.mxu0 0.0
  %741 = vmatpush1.msra.mxu0 0.0
  %742 = vmatprep.subr.mxu0 0.0
  %743 = vmatpush1.msra.mxu0 0.0
  %744 = vmatprep.subr.mxu0 0.0
  %745 = vmatpush1.msra.mxu0 0.0
  %746 = vmatprep.subr.mxu0 0.0
  %747 = vmatpush1.msra.mxu0 0.0
  %748 = vmatprep.subr.mxu0 0.0
  %749 = vmatpush1.msra.mxu0 0.0
  %750 = vmatprep.subr.mxu0 %v384
  %751 = vmatpush1.msra.mxu0 %v383
  %752 = vmatprep.subr.mxu0 0.0
  %753 = vmatpush2.msra.mxu0 0.0
  %754 = vmatprep.subr.mxu0 0.0
  %755 = vmatpush2.msra.mxu0 0.0
  %756 = vmatprep.subr.mxu0 0.0
  %757 = vmatpush2.msra.mxu0 0.0
  %758 = vmatprep.subr.mxu0 0.0
  %759 = vmatpush2.msra.mxu0 0.0
  %760 = vmatprep.subr.mxu0 0.0
  %761 = vmatpush2.msra.mxu0 0.0
  %762 = vmatprep.subr.mxu0 0.0
  %763 = vmatpush2.msra.mxu0 0.0
  %764 = vmatprep.subr.mxu0 0.0
  %765 = vmatpush2.msra.mxu0 0.0
  %766 = vmatprep.subr.mxu0 0.0
  %767 = vmatpush2.msra.mxu0 0.0
  %768 = vmatprep.subr.mxu0 0.0
  %769 = vmatpush2.msra.mxu0 0.0
  %770 = vmatprep.subr.mxu0 0.0
  %771 = vmatpush2.msra.mxu0 0.0
  %772 = vmatprep.subr.mxu0 0.0
  %773 = vmatpush2.msra.mxu0 0.0
  %774 = vmatprep.subr.mxu0 0.0
  %775 = vmatpush2.msra.mxu0 0.0
  %776 = vmatprep.subr.mxu0 0.0
  %777 = vmatpush2.msra.mxu0 0.0
  %778 = vmatprep.subr.mxu0 0.0
  %779 = vmatpush2.msra.mxu0 0.0
  %780 = vmatprep.subr.mxu0 0.0
  %781 = vmatpush2.msra.mxu0 0.0
  %782 = vmatprep.subr.mxu0 0.0
  %783 = vmatpush2.msra.mxu0 0.0
  %784 = vmatprep.mubr.f32.mxu0 0.0
  %785 = vmatmul.mubr.f32.gmra.mxu0 %v715
  %v786 = vpop.f32.mrf.mxu0
  %v787 = vadd.f32 0.0, %v786
  %v788 = vpop.f32.mrf.mxu0
  %v789 = vadd.f32 0.0, %v788
  %790 = vmatprep.mubr.f32.mxu0 0.0
  %791 = vmatmul.mubr.f32.gmra.mxu0 %v718
  %v792 = vpop.f32.mrf.mxu0
  %v793 = vadd.f32 0.0, %v792
  %v794 = vpop.f32.mrf.mxu0
  %v795 = vadd.f32 0.0, %v794
  %796 = vdwg.mxu0
  %797 = vmatprep.subr.mxu0 0.0
  %798 = vmatpush1.msra.mxu0 0.0
  %799 = vmatprep.subr.mxu0 0.0
  %800 = vmatpush1.msra.mxu0 0.0
  %801 = vmatprep.subr.mxu0 0.0
  %802 = vmatpush1.msra.mxu0 0.0
  %803 = vmatprep.subr.mxu0 0.0
  %804 = vmatpush1.msra.mxu0 0.0
  %805 = vmatprep.subr.mxu0 0.0
  %806 = vmatpush1.msra.mxu0 0.0
  %807 = vmatprep.subr.mxu0 0.0
  %808 = vmatpush1.msra.mxu0 0.0
  %809 = vmatprep.subr.mxu0 0.0
  %810 = vmatpush1.msra.mxu0 0.0
  %811 = vmatprep.subr.mxu0 0.0
  %812 = vmatpush1.msra.mxu0 0.0
  %813 = vmatprep.subr.mxu0 0.0
  %814 = vmatpush1.msra.mxu0 0.0
  %815 = vmatprep.subr.mxu0 0.0
  %816 = vmatpush1.msra.mxu0 0.0
  %817 = vmatprep.subr.mxu0 0.0
  %818 = vmatpush1.msra.mxu0 0.0
  %819 = vmatprep.subr.mxu0 0.0
  %820 = vmatpush1.msra.mxu0 0.0
  %821 = vmatprep.subr.mxu0 0.0
  %822 = vmatpush1.msra.mxu0 0.0
  %823 = vmatprep.subr.mxu0 0.0
  %824 = vmatpush1.msra.mxu0 0.0
  %825 = vmatprep.subr.mxu0 0.0
  %826 = vmatpush1.msra.mxu0 0.0
  %827 = vmatprep.subr.mxu0 %v386
  %828 = vmatpush1.msra.mxu0 %v385
  %829 = vmatprep.subr.mxu0 0.0
  %830 = vmatpush2.msra.mxu0 0.0
  %831 = vmatprep.subr.mxu0 0.0
  %832 = vmatpush2.msra.mxu0 0.0
  %833 = vmatprep.subr.mxu0 0.0
  %834 = vmatpush2.msra.mxu0 0.0
  %835 = vmatprep.subr.mxu0 0.0
  %836 = vmatpush2.msra.mxu0 0.0
  %837 = vmatprep.subr.mxu0 0.0
  %838 = vmatpush2.msra.mxu0 0.0
  %839 = vmatprep.subr.mxu0 0.0
  %840 = vmatpush2.msra.mxu0 0.0
  %841 = vmatprep.subr.mxu0 0.0
  %842 = vmatpush2.msra.mxu0 0.0
  %843 = vmatprep.subr.mxu0 0.0
  %844 = vmatpush2.msra.mxu0 0.0
  %845 = vmatprep.subr.mxu0 0.0
  %846 = vmatpush2.msra.mxu0 0.0
  %847 = vmatprep.subr.mxu0 0.0
  %848 = vmatpush2.msra.mxu0 0.0
  %849 = vmatprep.subr.mxu0 0.0
  %850 = vmatpush2.msra.mxu0 0.0
  %851 = vmatprep.subr.mxu0 0.0
  %852 = vmatpush2.msra.mxu0 0.0
  %853 = vmatprep.subr.mxu0 0.0
  %854 = vmatpush2.msra.mxu0 0.0
  %855 = vmatprep.subr.mxu0 0.0
  %856 = vmatpush2.msra.mxu0 0.0
  %857 = vmatprep.subr.mxu0 0.0
  %858 = vmatpush2.msra.mxu0 0.0
  %859 = vmatprep.subr.mxu0 0.0
  %860 = vmatpush2.msra.mxu0 0.0
  %861 = vmatprep.mubr.f32.mxu0 0.0
  %862 = vmatmul.mubr.f32.gmra.mxu0 %v715
  %v863 = vpop.f32.mrf.mxu0
  %v864 = vadd.f32 0.0, %v863
  %v865 = vpop.f32.mrf.mxu0
  %v866 = vadd.f32 0.0, %v865
  %867 = vmatprep.mubr.f32.mxu0 0.0
  %868 = vmatmul.mubr.f32.gmra.mxu0 %v718
  %v869 = vpop.f32.mrf.mxu0
  %v870 = vadd.f32 0.0, %v869
  %v871 = vpop.f32.mrf.mxu0
  %v872 = vadd.f32 0.0, %v871
  %873 = vdwg.mxu0
  %v874 = vadd.f32 %v625, %v787
  %v875 = vadd.f32 %v627, %v789
  %v876 = vadd.f32 %v702, %v864
  %v877 = vadd.f32 %v704, %v866
  %v878 = vadd.f32 %v631, %v793
  %v879 = vadd.f32 %v633, %v795
  %v880 = vadd.f32 %v708, %v870
  %v881 = vadd.f32 %v710, %v872
  %v882 = vld [vmem:[%s5] sm:$0xff]
  %v883 = vld [vmem:[%s5 + $0x8] sm:$0xff]
  %885 = vset.pattern.permute.xlu0 0
  %886 = vperm.xlu0 %885, %v882
  %v887 = vpop.permute.xlu0 %886
  %890 = vset.pattern.permute.xlu0 0
  %891 = vperm.xlu0 %890, %v883
  %v892 = vpop.permute.xlu0 %891
  %v894 = vadd.f32 %v874, %v887
  %v895 = vadd.f32 %v875, %v887
  %v896 = vadd.f32 %v876, %v887
  %v897 = vadd.f32 %v877, %v887
  %v898 = vadd.f32 %v878, %v892
  %v899 = vadd.f32 %v879, %v892
  %v900 = vadd.f32 %v880, %v892
  %v901 = vadd.f32 %v881, %v892
  %902 = vst [vmem:[%s6] sm:$0xff] %v894
  %903 = vst [vmem:[%s6 + $0x8] sm:$0xff] %v895
  %904 = vst [vmem:[%s6 + $0x10] sm:$0xff] %v896
  %905 = vst [vmem:[%s6 + $0x18] sm:$0xff] %v897
  %906 = vst [vmem:[%s6 + $0x20] sm:$0xff] %v898
  %907 = vst [vmem:[%s6 + $0x28] sm:$0xff] %v899
  %908 = vst [vmem:[%s6 + $0x30] sm:$0xff] %v900
  %909 = vst [vmem:[%s6 + $0x38] sm:$0xff] %v901
  // Predicated region
  $region26: #{spp_forward.1} parent=0 // pred_check
    _
  $region27: #{spp_forward.1} parent=0 // pred_check_branch
    %911 = sbr.rel (0) target = $region29
  $region28: #{spp_forward.1} parent=0 // pred_region
    _
  $region29: #{spp_forward.1} parent=0 // pred_fallthru
    _
  // Predicated region
  $region30: #{spp_forward.1} parent=0 // pred_check
    _
  $region31: #{spp_forward.1} parent=0 // pred_check_branch
    %913 = sbr.rel (0) target = $region33
  $region32: #{spp_forward.1} parent=0 // pred_region
    _
  $region33: #{spp_forward.1} parent=0 // pred_fallthru
    _

</llo_original>
